<compile_context>
chip_gen: v7x
topology: tpu7x:2x2x1
jax: 0.10.0
libtpu: 0.0.40
codegen_flags: <defaults>
</compile_context>

<pallas_src>
import functools

import jax
import jax.numpy as jnp
from jax import lax
from jax.experimental import pallas as pl
from jax.experimental.pallas import tpu as pltpu


def attention_kernel(x_ref, w_ref, b_ref, q_ref, u_ref, o_ref, *,
                     keep_prob, approx_recip):
    # x_ref : (TB, S, Fin)  bf16   batch tile
    # w_ref : (Fout, Fin)   bf16   PyTorch Linear weight layout (no transpose)
    # b_ref : (1, Fout)     f32
    # q_ref : (1, Fout)     f32
    # u_ref : (TB, Fout)    f32    uniform [0,1) for dropout
    # o_ref : (TB, Fout)    f32
    TB, S, Fin = x_ref.shape
    Fout = w_ref.shape[0]

    # Fused projection: one (TB*S, Fin) x (Fin, Fout) MXU pass, f32 accumulate.
    x2 = x_ref[...].reshape(TB * S, Fin)
    hidden = lax.dot_general(
        x2, w_ref[...],
        dimension_numbers=(((1,), (1,)), ((), ())),   # contract Fin with Fin
        preferred_element_type=jnp.float32,
    )                                                 # (TB*S, Fout)
    hidden = hidden + b_ref[...]                      # broadcast (1, Fout)
    hidden = hidden.reshape(TB, S, Fout)              # (TB, S, Fout)

    # Attention scores: VPU multiply + lane reduction over Fout -> (TB, S),
    # keeping the softmax axis (sequence) on lanes.
    q_row = q_ref[...].reshape(1, 1, Fout)
    atten = jnp.sum(hidden * q_row, axis=-1)          # (TB, S)

    # Numerically-stable softmax over the sequence axis (dim=1 of (B, S)).
    m = jnp.max(atten, axis=-1, keepdims=True)        # (TB, 1)
    e = jnp.exp(atten - m)
    denom = jnp.sum(e, axis=-1, keepdims=True)        # (TB, 1)
    p = e * pl.reciprocal(denom, approx=approx_recip)  # (TB, S)

    # Attention-weighted pooling: fuse_embed = sum_s p[b,s] * hidden[b,s,:].
    fuse = jnp.sum(p[:, :, None] * hidden, axis=1)    # (TB, Fout)

    # Inverted dropout (F.dropout with training=True): keep w.p. keep_prob,
    # scale kept values by 1/keep_prob.
    keep = u_ref[...] < keep_prob
    out = jnp.where(keep, fuse * (1.0 / keep_prob), jnp.zeros_like(fuse))

    o_ref[...] = out.astype(o_ref.dtype)


@functools.partial(jax.jit, static_argnames=("drop_rt", "batch_tile"))
def attention_layer(inputs, weight, bias, q, dropout_key, *,
                    drop_rt=0.4, batch_tile=None):
    """inputs: (B, S, Fin), weight: (Fout, Fin), bias: (Fout,), q: (Fout,)."""
    B, S, Fin = inputs.shape
    Fout = weight.shape[0]
    keep_prob = 1.0 - drop_rt

    # Batch tile: process TB batch rows per grid step (whole batch if small).
    TB = batch_tile if batch_tile is not None else min(B, 128)
    B_pad = ((B + TB - 1) // TB) * TB

    x = inputs.astype(jnp.bfloat16)                   # bf16 HBM stream
    if B_pad != B:
        x = jnp.pad(x, ((0, B_pad - B), (0, 0), (0, 0)))
    w = weight.astype(jnp.bfloat16)                   # (Fout, Fin), untransposed
    b2 = bias.reshape(1, Fout).astype(jnp.float32)
    q2 = q.reshape(1, Fout).astype(jnp.float32)
    # One draw per invocation covering every batch element (no per-row seeding).
    u = jax.random.uniform(dropout_key, (B_pad, Fout), dtype=jnp.float32)

    # approx reciprocal only lowers on real TPU; exact path elsewhere.
    approx_recip = jax.default_backend() == "tpu"

    kernel = functools.partial(attention_kernel,
                               keep_prob=keep_prob,
                               approx_recip=approx_recip)

    out = pl.pallas_call(
        kernel,
        out_shape=jax.ShapeDtypeStruct((B_pad, Fout), jnp.float32),
        grid_spec=pltpu.PrefetchScalarGridSpec(
            num_scalar_prefetch=0,
            grid=(B_pad // TB,),
            in_specs=[
                pl.BlockSpec((TB, S, Fin), lambda i: (i, 0, 0)),
                pl.BlockSpec((Fout, Fin), lambda i: (0, 0)),
                pl.BlockSpec((1, Fout), lambda i: (0, 0)),
                pl.BlockSpec((1, Fout), lambda i: (0, 0)),
                pl.BlockSpec((TB, Fout), lambda i: (i, 0)),
            ],
            out_specs=pl.BlockSpec((TB, Fout), lambda i: (i, 0)),
        ),
        compiler_params=pltpu.CompilerParams(
            dimension_semantics=("parallel",),        # independent batch tiles
            vmem_limit_bytes=32 * 1024 * 1024,
        ),
    )(x, w, b2, q2, u)

    # Matches fuse_embed.squeeze_() for B > 1 (for B == 1 PyTorch would give
    # a rank-1 (Fout,) tensor; we keep (1, Fout)).
    return out[:B]


if __name__ == "__main__":
    B, S, Fin, Fout = 2, 8, 16, 32

    key = jax.random.PRNGKey(0)
    k_x, k_w, k_b, k_q, k_drop = jax.random.split(key, 5)

    # Deterministic parameter init mirroring the PyTorch module's __init__:
    #   xavier_normal_(linear.weight), default Linear bias init, q ~ randn.
    xavier_std = (2.0 / (Fin + Fout)) ** 0.5
    weight = xavier_std * jax.random.normal(k_w, (Fout, Fin), dtype=jnp.float32)
    bound = 1.0 / (Fin ** 0.5)
    bias = jax.random.uniform(k_b, (Fout,), minval=-bound, maxval=bound,
                              dtype=jnp.float32)
    q = jax.random.normal(k_q, (Fout,), dtype=jnp.float32)

    x = jax.random.normal(k_x, (B, S, Fin), dtype=jnp.float32)

    out = attention_layer(x, weight, bias, q, k_drop)
    jax.block_until_ready(out)
    assert out.shape == (B, Fout), out.shape
    print("KERNEL_OK")
</pallas_src>

<mosaic_0001>
module attributes {stable_mosaic.version = 11 : i64} {
  func.func @attention_kernel(%arg0: i32, %arg1: memref<2x8x16xbf16, #tpu.memory_space<vmem>>, %arg2: memref<32x16xbf16, #tpu.memory_space<vmem>>, %arg3: memref<1x32xf32, #tpu.memory_space<vmem>>, %arg4: memref<1x32xf32, #tpu.memory_space<vmem>>, %arg5: memref<2x32xf32, #tpu.memory_space<vmem>>, %arg6: memref<2x32xf32, #tpu.memory_space<vmem>>) attributes {dimension_semantics = [#tpu.dimension_semantics<parallel>], iteration_bounds = array<i64: 1>, scalar_prefetch = 0 : i64, scratch_operands = 0 : i64, tpu.core_type = #tpu.core_type<tc>, window_params = [{transform_indices = @transform_0, window_bounds = array<i64: 2, 8, 16>}, {pipeline_mode = #tpu.pipeline_mode<synchronous>, transform_indices = @transform_1, window_bounds = array<i64: 32, 16>}, {pipeline_mode = #tpu.pipeline_mode<synchronous>, transform_indices = @transform_2, window_bounds = array<i64: 1, 32>}, {pipeline_mode = #tpu.pipeline_mode<synchronous>, transform_indices = @transform_3, window_bounds = array<i64: 1, 32>}, {transform_indices = @transform_4, window_bounds = array<i64: 2, 32>}, {transform_indices = @transform_5, window_bounds = array<i64: 2, 32>}]} {
    %c0 = arith.constant 0 : index
    %c0_0 = arith.constant 0 : index
    %c0_1 = arith.constant 0 : index
    %0 = vector.load %arg1[%c0, %c0_0, %c0_1] : memref<2x8x16xbf16, #tpu.memory_space<vmem>>, vector<2x8x16xbf16>
    %1 = vector.shape_cast %0 : vector<2x8x16xbf16> to vector<16x16xbf16>
    %c0_2 = arith.constant 0 : index
    %c0_3 = arith.constant 0 : index
    %2 = vector.load %arg2[%c0_2, %c0_3] : memref<32x16xbf16, #tpu.memory_space<vmem>>, vector<32x16xbf16>
    %cst = arith.constant dense<0.000000e+00> : vector<16x32xf32>
    %3 = tpu.matmul %1, %2, %cst {dimension_numbers = #tpu.dot_dimension_numbers<[1], [1], [0], [0], [0, 0, 1, 0], [], []>} : vector<16x16xbf16>, vector<32x16xbf16>, vector<16x32xf32> -> vector<16x32xf32>
    %c0_4 = arith.constant 0 : index
    %c0_5 = arith.constant 0 : index
    %4 = vector.load %arg3[%c0_4, %c0_5] : memref<1x32xf32, #tpu.memory_space<vmem>>, vector<1x32xf32>
    %5 = vector.broadcast %4 : vector<1x32xf32> to vector<16x32xf32>
    %6 = arith.addf %3, %5 : vector<16x32xf32>
    %7 = vector.shape_cast %6 : vector<16x32xf32> to vector<2x8x32xf32>
    %c0_6 = arith.constant 0 : index
    %c0_7 = arith.constant 0 : index
    %8 = vector.load %arg4[%c0_6, %c0_7] : memref<1x32xf32, #tpu.memory_space<vmem>>, vector<1x32xf32>
    %9 = vector.shape_cast %8 : vector<1x32xf32> to vector<1x1x32xf32>
    %10 = vector.broadcast %9 : vector<1x1x32xf32> to vector<2x8x32xf32>
    %11 = arith.mulf %7, %10 : vector<2x8x32xf32>
    %cst_8 = arith.constant dense<0.000000e+00> : vector<2x8xf32>
    %12 = vector.multi_reduction <add>, %11, %cst_8 [2] : vector<2x8x32xf32> to vector<2x8xf32>
    %cst_9 = arith.constant dense<0xFF800000> : vector<2xf32>
    %13 = vector.multi_reduction <maximumf>, %12, %cst_9 [1] : vector<2x8xf32> to vector<2xf32>
    %14 = vector.shape_cast %13 : vector<2xf32> to vector<2x1xf32>
    %15 = vector.broadcast %14 : vector<2x1xf32> to vector<2x8xf32>
    %16 = arith.subf %12, %15 : vector<2x8xf32>
    %17 = math.exp %16 : vector<2x8xf32>
    %cst_10 = arith.constant dense<0.000000e+00> : vector<2xf32>
    %18 = vector.multi_reduction <add>, %17, %cst_10 [1] : vector<2x8xf32> to vector<2xf32>
    %19 = vector.shape_cast %18 : vector<2xf32> to vector<2x1xf32>
    %20 = tpu.reciprocal %19 : vector<2x1xf32> -> vector<2x1xf32>
    %21 = vector.broadcast %20 : vector<2x1xf32> to vector<2x8xf32>
    %22 = arith.mulf %17, %21 : vector<2x8xf32>
    %23 = vector.shape_cast %22 : vector<2x8xf32> to vector<2x8x1xf32>
    %24 = vector.broadcast %23 : vector<2x8x1xf32> to vector<2x8x32xf32>
    %25 = arith.mulf %24, %7 : vector<2x8x32xf32>
    %cst_11 = arith.constant dense<0.000000e+00> : vector<2x32xf32>
    %26 = vector.multi_reduction <add>, %25, %cst_11 [1] : vector<2x8x32xf32> to vector<2x32xf32>
    %c0_12 = arith.constant 0 : index
    %c0_13 = arith.constant 0 : index
    %27 = vector.load %arg5[%c0_12, %c0_13] : memref<2x32xf32, #tpu.memory_space<vmem>>, vector<2x32xf32>
    %cst_14 = arith.constant 6.000000e-01 : f32
    %28 = vector.broadcast %cst_14 : f32 to vector<2x32xf32>
    %29 = arith.cmpf olt, %27, %28 : vector<2x32xf32>
    %cst_15 = arith.constant 1.66666663 : f32
    %30 = vector.broadcast %cst_15 : f32 to vector<2x32xf32>
    %31 = arith.mulf %26, %30 : vector<2x32xf32>
    %cst_16 = arith.constant 0.000000e+00 : f32
    %32 = vector.broadcast %cst_16 : f32 to vector<2x32xf32>
    %33 = arith.select %29, %31, %32 : vector<2x32xi1>, vector<2x32xf32>
    %c0_17 = arith.constant 0 : index
    %c0_18 = arith.constant 0 : index
    %34 = vector.load %arg6[%c0_17, %c0_18] : memref<2x32xf32, #tpu.memory_space<vmem>>, vector<2x32xf32>
    tpu.vector_store %arg6[%c0_17, %c0_18], %33 {strides = array<i32>} : memref<2x32xf32, #tpu.memory_space<vmem>>, vector<2x32xf32>,
    return
  }
  func.func @transform_0(%arg0: i32) -> (i32, i32, i32) {
    %c0_i32 = arith.constant 0 : i32
    %c0_i32_0 = arith.constant 0 : i32
    %c0_i32_1 = arith.constant 0 : i32
    return %arg0, %c0_i32, %c0_i32_0 : i32, i32, i32
  }
  func.func @transform_1(%arg0: i32) -> (i32, i32) {
    %c0_i32 = arith.constant 0 : i32
    %c0_i32_0 = arith.constant 0 : i32
    %c0_i32_1 = arith.constant 0 : i32
    return %c0_i32, %c0_i32_0 : i32, i32
  }
  func.func @transform_2(%arg0: i32) -> (i32, i32) {
    %c0_i32 = arith.constant 0 : i32
    %c0_i32_0 = arith.constant 0 : i32
    %c0_i32_1 = arith.constant 0 : i32
    return %c0_i32, %c0_i32_0 : i32, i32
  }
  func.func @transform_3(%arg0: i32) -> (i32, i32) {
    %c0_i32 = arith.constant 0 : i32
    %c0_i32_0 = arith.constant 0 : i32
    %c0_i32_1 = arith.constant 0 : i32
    return %c0_i32, %c0_i32_0 : i32, i32
  }
  func.func @transform_4(%arg0: i32) -> (i32, i32) {
    %c0_i32 = arith.constant 0 : i32
    %c0_i32_0 = arith.constant 0 : i32
    return %arg0, %c0_i32 : i32, i32
  }
  func.func @transform_5(%arg0: i32) -> (i32, i32) {
    %c0_i32 = arith.constant 0 : i32
    %c0_i32_0 = arith.constant 0 : i32
    return %arg0, %c0_i32 : i32, i32
  }
}

</mosaic_0001>

<llo_original>
// kernel: attention_layer.1
$region0: #{attention_layer.1}
  #allocation0 [shape = 'u32[]', space=smem, size = 0x4, offset = 0x4, fixed_abs, tag = 'smem constant byte address 0x4 - core index']
  #allocation1 [shape = 'u32[144,128]{1,0:T(1,128)}', space=vmem, size = 0x12000, scoped, tag = 'internal scratch']
  %s0 = inlined_call_operand.vmem [shape: bf16[2,8,16], index: 0, kind: input, shape index: {}]
  %s1 = inlined_call_operand.vmem [shape: bf16[32,16], index: 1, kind: input, shape index: {}]
  %s2 = inlined_call_operand.vmem [shape: f32[1,32], index: 2, kind: input, shape index: {}]
  %s3 = inlined_call_operand.vmem [shape: f32[1,32], index: 3, kind: input, shape index: {}]
  %s4 = inlined_call_operand.vmem [shape: f32[2,32], index: 4, kind: input, shape index: {}]
  %s5 = inlined_call_operand.hbm [shape: f32[2,32], index: 5, kind: output, shape index: {}]
  %s6 = sld [smem:[#allocation0]]
  $region30: #{attention_layer.1} parent=0
    _
  %s8 = ssub.s32 1, %s6
  %s9 = scalar_select 0, %s8, %s6
  $region1: #{attention_layer.1} parent=0
    #allocation2 [shape = 'u8[1024]{0}', space=vmem, size = 0x400, scoped, tag = 'output window, operand 0, single buffered']
    #allocation3 [shape = 's32[1]{0}', space=sflag, size = 0x4, scoped, tag = 'scoped memory for attention_layer.1']
    %10 = vsyncpa [#allocation3], 0
    // Predicated region
    $region2: #{attention_layer.1} parent=1 // pred_check
      _
    $region3: #{attention_layer.1} parent=1 // pred_check_branch
      %12 = sbr.rel (0) target = $region5
    $region4: #{attention_layer.1} parent=1 // pred_region
      _
    $region5: #{attention_layer.1} parent=1 // pred_fallthru
      _
    // Predicated region
    $region6: #{attention_layer.1} parent=1 // pred_check
      _
    $region7: #{attention_layer.1} parent=1 // pred_check_branch
      %14 = sbr.rel (0) target = $region9
    $region8: #{attention_layer.1} parent=1 // pred_region
      _
    $region9: #{attention_layer.1} parent=1 // pred_fallthru
      _
    // Predicated region
    $region10: #{attention_layer.1} parent=1 // pred_check
      _
    $region11: #{attention_layer.1} parent=1 // pred_check_branch
      %16 = sbr.rel (0) target = $region13
    $region12: #{attention_layer.1} parent=1 // pred_region
      _
    $region13: #{attention_layer.1} parent=1 // pred_fallthru
      _
    // Predicated region
    $region14: #{attention_layer.1} parent=1 // pred_check
      _
    $region15: #{attention_layer.1} parent=1 // pred_check_branch
      %18 = sbr.rel (0) target = $region17
    $region16: #{attention_layer.1} parent=1 // pred_region
      _
    $region17: #{attention_layer.1} parent=1 // pred_fallthru
      _
    // Predicated region
    $region18: #{attention_layer.1} parent=1 // pred_check
      _
    $region19: #{attention_layer.1} parent=1 // pred_check_branch
      %20 = sbr.rel (0) target = $region21
    $region20: #{attention_layer.1} parent=1 // pred_region
      _
    $region21: #{attention_layer.1} parent=1 // pred_fallthru
      _
    %v22 = vld [vmem:[%s0] sm:$0xf]
    %v23 = vld [vmem:[%s0 + $0x4] sm:$0xf]
    %v24 = vld [vmem:[%s1] sm:$0xf]
    %v25 = vld [vmem:[%s1 + $0x4] sm:$0xf]
    %v26 = vld [vmem:[%s1 + $0x8] sm:$0xf]
    %v27 = vld [vmem:[%s1 + $0xc] sm:$0xf]
    %v28 = vld [vmem:[%s2] sm:$0x1]
    %v30 = vlaneseq
    %v31 = vshrl.u32 %v30, 7
    %v32 = vsub.s32 0, %v31
    %v33 = vrot.slane %v28, %v32
    %v37 = vunpack.c.l.b16 %v22
    %v38 = vunpack.c.l.b16 %v23
    %v39 = vpack.c.b16 %v38, %v37
    %v44 = vunpack.c.l.b16 %v24
    %v45 = vunpack.c.l.b16 %v25
    %v46 = vunpack.c.l.b16 %v26
    %v47 = vunpack.c.l.b16 %v27
    %v48 = vpack.c.b16 %v45, %v44
    %v49 = vpack.c.b16 %v47, %v46
    %vm50 = vcmask 130048
    %v52 = vsel %vm50, %v39, 0
    %v55 = vsel %vm50, %v48, 0
    %v58 = vsel %vm50, %v49, 0
    %60 = vmatprep.subr.bf16.mxu0 0
    %61 = vmatpush1.bf16.xpose.msra.mxu0 %v55
    %62 = vmatprep.subr.bf16.mxu0 0
    %63 = vmatpush1.bf16.xpose.msra.mxu0 %v58
    %64 = vmatprep.subr.bf16.mxu0 0
    %65 = vmatpush1.bf16.xpose.msra.mxu0 0
    %66 = vmatprep.subr.bf16.mxu0 0
    %67 = vmatpush1.bf16.xpose.msra.mxu0 0
    %68 = vmatprep.subr.bf16.mxu0 0
    %69 = vmatpush1.bf16.xpose.msra.mxu0 0
    %70 = vmatprep.subr.bf16.mxu0 0
    %71 = vmatpush1.bf16.xpose.msra.mxu0 0
    %72 = vmatprep.subr.bf16.mxu0 0
    %73 = vmatpush1.bf16.xpose.msra.mxu0 0
    %74 = vmatprep.subr.bf16.mxu0 0
    %75 = vmatpush1.bf16.xpose.msra.mxu0 0
    %76 = vmatprep.subr.bf16.mxu0 0
    %77 = vmatpush1.bf16.xpose.msra.mxu0 0
    %78 = vmatprep.subr.bf16.mxu0 0
    %79 = vmatpush1.bf16.xpose.msra.mxu0 0
    %80 = vmatprep.subr.bf16.mxu0 0
    %81 = vmatpush1.bf16.xpose.msra.mxu0 0
    %82 = vmatprep.subr.bf16.mxu0 0
    %83 = vmatpush1.bf16.xpose.msra.mxu0 0
    %84 = vmatprep.subr.bf16.mxu0 0
    %85 = vmatpush1.bf16.xpose.msra.mxu0 0
    %86 = vmatprep.subr.bf16.mxu0 0
    %87 = vmatpush1.bf16.xpose.msra.mxu0 0
    %88 = vmatprep.subr.bf16.mxu0 0
    %89 = vmatpush1.bf16.xpose.msra.mxu0 0
    %90 = vmatprep.subr.bf16.mxu0 0
    %91 = vmatpush1.bf16.xpose.msra.mxu0 0
    %92 = vmatprep.mubr.bf16.mxu0 0
    %93 = vmatmul.mubr.bf16.gmra.mrb[0].mxu0 %v52
    %v94 = vpop.f32.mrb[0].mxu0
    %v95 = vadd.f32 %v33, %v94
    %v96 = vpop.f32.mrb[0].mxu0
    %v97 = vpop.f32.mrb[0].mxu0
    %v98 = vadd.f32 %v33, %v97
    %v99 = vpop.f32.mrb[0].mxu0
    %100 = vdwg.mxu0
    %v101 = vld [vmem:[%s3] sm:$0x1]
    %v103 = vlaneseq
    %v104 = vshrl.u32 %v103, 7
    %v105 = vsub.s32 0, %v104
    %v106 = vrot.slane %v101, %v105
    %v108 = vmul.f32 %v95, %v106
    %v109 = vmul.f32 %v98, %v106
    %vm110 = vcmask 261120
    %v111 = vsel %vm110, %v108, 0.0
    %112 = vadd.xlane.f32.xlu0 %v111
    %v113 = vpop.xlane.xlu0 %112
    %v114 = vsel %vm110, %v109, 0.0
    %115 = vadd.xlane.f32.xlu0 %v114
    %v116 = vpop.xlane.xlu0 %115
    %v119 = vlaneseq
    %v120 = vand.u32 %v119, 127
    %v121 = vlaneseq
    %v122 = vshrl.u32 %v121, 7
    %v123 = vsub.s32 %v120, %v122
    %v124 = vrot.slane %v113, %v123
    %v125 = vlaneseq
    %v126 = vshrl.u32 %v125, 7
    %v127 = vsub.s32 %v120, %v126
    %v128 = vrot.slane %v116, %v127
    %vm129 = vcmask 1041409
    %v130 = vsel %vm129, %v128, %v124
    %vm132 = vcmask 58368
    %v133 = vsel %vm132, %v130, -inf
    %134 = vmax.xlane.f32.xlu0 %v133
    %v135 = vpop.xlane.xlu0 %134
    %v137 = vlaneseq
    %v138 = vshrl.u32 %v137, 7
    %v139 = vsub.s32 0, %v138
    %v140 = vrot.slane %v135, %v139
    %v141 = vlaneseq
    %v142 = vshrl.u32 %v141, 7
    %v143 = vsub.s32 1, %v142
    %v144 = vrot.slane %v135, %v143
    %v147 = vsub.f32 %v113, %v140
    %v148 = vsub.f32 %v116, %v144
    %v149 = vmul.f32 %v147, 1.442695
    %v150 = vpow.pop %v149
    %v151 = vmul.f32 %v148, 1.442695
    %v152 = vpow.pop %v151
    %155 = vset.pattern.permute.xlu0 0
    %156 = vperm.xlu0 %155, %v150
    %v157 = vpop.permute.xlu0 %156
    %158 = vset.pattern.permute.xlu0 0
    %159 = vperm.xlu0 %158, %v152
    %v160 = vpop.permute.xlu0 %159
    %v161 = vlaneseq
    %v162 = vshrl.u32 %v161, 7
    %v163 = vsub.s32 %v120, %v162
    %v164 = vrot.slane %v157, %v163
    %v165 = vlaneseq
    %v166 = vshrl.u32 %v165, 7
    %v167 = vsub.s32 %v120, %v166
    %v168 = vrot.slane %v160, %v167
    %v169 = vsel %vm129, %v168, %v164
    %v171 = vsel %vm132, %v169, 0.0
    %172 = vadd.xlane.f32.xlu0 %v171
    %v173 = vpop.xlane.xlu0 %172
    %v174 = vrcp.pop %v173
    %v176 = vlaneseq
    %v177 = vshrl.u32 %v176, 7
    %v178 = vsub.s32 0, %v177
    %v179 = vrot.slane %v174, %v178
    %v180 = vlaneseq
    %v181 = vshrl.u32 %v180, 7
    %v182 = vsub.s32 1, %v181
    %v183 = vrot.slane %v174, %v182
    %v186 = vmul.f32 %v150, %v179
    %v187 = vmul.f32 %v152, %v183
    %189 = vset.pattern.permute.xlu0 0
    %190 = vperm.xlu0 %189, %v186
    %v191 = vpop.permute.xlu0 %190
    %194 = vset.pattern.permute.xlu0 0
    %195 = vperm.xlu0 %194, %v187
    %v196 = vpop.permute.xlu0 %195
    %v198 = vmul.f32 %v191, %v95
    %v199 = vmul.f32 %v196, %v98
    %v200 = vsel %vm110, %v198, 0.0
    %v201 = vrot.slane %v200, 4
    %v202 = vadd.f32 %v200, %v201
    %v203 = vrot.slane %v202, 2
    %v204 = vadd.f32 %v202, %v203
    %v205 = vrot.slane %v204, 1
    %v206 = vadd.f32 %v204, %v205
    %v207 = vsel %vm110, %v199, 0.0
    %v208 = vrot.slane %v207, 4
    %v209 = vadd.f32 %v207, %v208
    %v210 = vrot.slane %v209, 2
    %v211 = vadd.f32 %v209, %v210
    %v212 = vrot.slane %v211, 1
    %v213 = vadd.f32 %v211, %v212
    %v214 = vld [vmem:[%s4] sm:$0x3]
    %vm215 = vcmp.lt.f32.partialorder %v214, 0.6
    %v216 = vmul.f32 %v206, 1.6666666
    %v217 = vmul.f32 %v213, 1.6666666
    %v220 = vsel %vm129, %v217, %v216
    %v222 = vsel %vm215, %v220, 0.0
    %vm223 = vcmask 254976
    %224 = vst.msk [vmem:[#allocation2] sm:$0x3] %vm223, %v222
    // Predicated region
    $region22: #{attention_layer.1} parent=1 // pred_check
      _
    $region23: #{attention_layer.1} parent=1 // pred_check_branch
      %226 = sbr.rel (0) target = $region25
    $region24: #{attention_layer.1} parent=1 // pred_region
      %s228 = ssub.s32 32, 32
      %229 = vsyncadd [#allocation3], %s228
      %s231 = sshll.u32 [#allocation2], 4
      %s232 = int_to_ptr.vmem [resolvable:$true] %s231
      %234 = dma.vmem_to_hbm [thread:$0]  %s232, 32, %s5, [#allocation3]
    $region25: #{attention_layer.1} parent=1 // pred_fallthru
      _
    // Predicated region
    $region26: #{attention_layer.1} parent=1 // pred_check
      _
    $region27: #{attention_layer.1} parent=1 // pred_check_branch
      %236 = sbr.rel (0) target = $region29
    $region28: #{attention_layer.1} parent=1 // pred_region
      %237 = dma.done [#allocation3], 32
    $region29: #{attention_layer.1} parent=1 // pred_fallthru
      _
    %238 = vsyncpa [#allocation3], 1

</llo_original>
